<compile_context>
chip_gen: v6e
topology: v6e:2x2x1
jax: 0.10.0
libtpu: 0.0.40
codegen_flags: <defaults>
</compile_context>

<pallas_src>
import jax
import jax.numpy as jnp
from jax.experimental import pallas as pl
from jax.experimental.pallas import tpu as pltpu


def _vap_kernel(z2_ref, c1_ref, w1b_ref, w2a_ref, w2b_ref, b2_ref, o_ref):
    """One (TM, H) row-tile of the fused forward.

    y   = x2 @ W1[H:] + c1_row     (c1_row = mean[row % B] @ W1[:H] + b1,
                                    precomputed & tiled in the wrapper)
    out = x2 @ W2[:H] + y @ W2[H:] + b2
    """
    x2 = z2_ref[...]                                               # (TM, H)
    y = (jnp.dot(x2, w1b_ref[...], preferred_element_type=jnp.float32)
         + c1_ref[...])                                            # (TM, INTER)
    out = (jnp.dot(x2, w2a_ref[...], preferred_element_type=jnp.float32)
           + jnp.dot(y, w2b_ref[...], preferred_element_type=jnp.float32)
           + b2_ref[...])
    o_ref[...] = out.astype(o_ref.dtype)


def _choose_row_tile(b, s, target_rows=512):
    """Largest TM = b*k with k | s and TM <= max(target_rows, b).

    TM being a multiple of b keeps the (row % b) constant pattern identical in
    every tile; k | s keeps the grid exact (no padded last tile).  Prefer
    8-aligned TM for the (8, 128) sublane tiling.
    """
    cands = [b * k for k in range(1, s + 1)
             if s % k == 0 and b * k <= max(target_rows, b)]
    aligned = [c for c in cands if c % 8 == 0 or c == b * s]
    return max(aligned) if aligned else max(cands)


def vector_adjust_prior(z, w1, b1, w2, b2, *, target_rows=512):
    """z: (B, S, H) float32.
    w1: (2H, INTER), b1: (INTER,)  -- vector_proj (torch weight transposed)
    w2: (H+INTER, H), b2: (H,)     -- out_proj   (torch weight transposed)
    returns (B, S, H) float32."""
    b, s, h = z.shape
    inter = b1.shape[0]
    assert w1.shape == (2 * h, inter) and w2.shape == (h + inter, h)

    rows = b * s
    tm = _choose_row_tile(b, s, target_rows)
    grid = (rows // tm,)

    # ---- cheap precompute (tiny, done once by XLA outside the kernel) ----
    z2 = z.reshape(rows, h)                        # row i == z[i // S, i % S]
    mean = jnp.mean(z, axis=1)                     # (B, H)
    # tile(mean, (S,1)) @ W1[:H] + b1 == tile(mean @ W1[:H] + b1, (S,1))
    c1 = jnp.dot(mean, w1[:h]) + b1                # (B, INTER)
    # tile starts are multiples of B (tm % b == 0), so the per-row constant
    # pattern c1[row % B] is identical in every tile:
    c1_tile = jnp.tile(c1, (tm // b, 1))           # (TM, INTER), VMEM-resident

    w1b = w1[h:]                                   # (H, INTER)
    w2a = w2[:h]                                   # (H, H)
    w2b = w2[h:]                                   # (INTER, H)
    b2_2d = b2.reshape(1, h)

    flops = 2 * rows * (2 * h * inter + h * h)
    bytes_accessed = 4 * (2 * rows * h            # z2 stream in + out stream out
                          + h * inter + h * h + inter * h   # weights
                          + tm * inter + h)                  # constants

    out_flat = pl.pallas_call(
        _vap_kernel,
        out_shape=jax.ShapeDtypeStruct((rows, h), jnp.float32),
        grid=grid,
        in_specs=[
            pl.BlockSpec((tm, h), lambda i: (i, 0)),       # z2: streamed tiles
            pl.BlockSpec((tm, inter), lambda i: (0, 0)),   # c1_tile: resident
            pl.BlockSpec((h, inter), lambda i: (0, 0)),    # W1[H:]
            pl.BlockSpec((h, h), lambda i: (0, 0)),        # W2[:H]
            pl.BlockSpec((inter, h), lambda i: (0, 0)),    # W2[H:]
            pl.BlockSpec((1, h), lambda i: (0, 0)),        # b2
        ],
        out_specs=pl.BlockSpec((tm, h), lambda i: (i, 0)),
        compiler_params=pltpu.CompilerParams(
            dimension_semantics=("parallel",)),
        cost_estimate=pl.CostEstimate(
            flops=flops, transcendentals=0, bytes_accessed=bytes_accessed),
    )(z2, c1_tile, w1b, w2a, w2b, b2_2d)

    return out_flat.reshape(b, s, h)


def reference(z, w1, b1, w2, b2):
    """Pure-JAX transcription of the PyTorch forward (for verification)."""
    b, s, h = z.shape
    x1 = jnp.tile(jnp.mean(z, axis=1), (s, 1))     # torch .repeat(s, 1)
    x2 = z.reshape(b * s, h)
    x = jnp.concatenate((x1, x2), axis=1)
    x = x @ w1 + b1
    x = jnp.concatenate((x2, x), axis=1)
    x = x @ w2 + b2
    return x.reshape(b, s, h)


if __name__ == "__main__":
    B, S, H, INTER = 2, 8, 32, 64

    key = jax.random.PRNGKey(0)
    k1, k2, k3, k4, k5 = jax.random.split(key, 5)

    # deterministic synthetic parameters; stored as torch_weight.T
    w1 = jax.random.normal(k1, (2 * H, INTER), jnp.float32) * 0.05  # vector_proj.weight.T
    b1 = jax.random.normal(k2, (INTER,), jnp.float32) * 0.05        # vector_proj.bias
    w2 = jax.random.normal(k3, (H + INTER, H), jnp.float32) * 0.05  # out_proj.weight.T
    b2 = jax.random.normal(k4, (H,), jnp.float32) * 0.05            # out_proj.bias

    z = jax.random.normal(k5, (B, S, H), jnp.float32)

    out = jax.block_until_ready(vector_adjust_prior(z, w1, b1, w2, b2))
    ref = reference(z, w1, b1, w2, b2)

    assert out.shape == (B, S, H), out.shape
    assert jnp.allclose(out, ref, atol=1e-4, rtol=1e-4), (
        float(jnp.max(jnp.abs(out - ref))))

    print("KERNEL_OK")
</pallas_src>

<mosaic_0001>
module attributes {stable_mosaic.version = 11 : i64} {
  func.func @_vap_kernel(%arg0: i32, %arg1: memref<16x32xf32, #tpu.memory_space<vmem>>, %arg2: memref<16x64xf32, #tpu.memory_space<vmem>>, %arg3: memref<32x64xf32, #tpu.memory_space<vmem>>, %arg4: memref<32x32xf32, #tpu.memory_space<vmem>>, %arg5: memref<64x32xf32, #tpu.memory_space<vmem>>, %arg6: memref<1x32xf32, #tpu.memory_space<vmem>>, %arg7: memref<16x32xf32, #tpu.memory_space<vmem>>) attributes {dimension_semantics = [#tpu.dimension_semantics<parallel>], iteration_bounds = array<i64: 1>, scalar_prefetch = 0 : i64, scratch_operands = 0 : i64, tpu.core_type = #tpu.core_type<tc>, window_params = [{transform_indices = @transform_0, window_bounds = array<i64: 16, 32>}, {pipeline_mode = #tpu.pipeline_mode<synchronous>, transform_indices = @transform_1, window_bounds = array<i64: 16, 64>}, {pipeline_mode = #tpu.pipeline_mode<synchronous>, transform_indices = @transform_2, window_bounds = array<i64: 32, 64>}, {pipeline_mode = #tpu.pipeline_mode<synchronous>, transform_indices = @transform_3, window_bounds = array<i64: 32, 32>}, {pipeline_mode = #tpu.pipeline_mode<synchronous>, transform_indices = @transform_4, window_bounds = array<i64: 64, 32>}, {pipeline_mode = #tpu.pipeline_mode<synchronous>, transform_indices = @transform_5, window_bounds = array<i64: 1, 32>}, {transform_indices = @transform_6, window_bounds = array<i64: 16, 32>}]} {
    %c0 = arith.constant 0 : index
    %c0_0 = arith.constant 0 : index
    %0 = vector.load %arg1[%c0, %c0_0] : memref<16x32xf32, #tpu.memory_space<vmem>>, vector<16x32xf32>
    %c0_1 = arith.constant 0 : index
    %c0_2 = arith.constant 0 : index
    %1 = vector.load %arg3[%c0_1, %c0_2] : memref<32x64xf32, #tpu.memory_space<vmem>>, vector<32x64xf32>
    %cst = arith.constant dense<0.000000e+00> : vector<16x64xf32>
    %2 = tpu.matmul %0, %1, %cst {dimension_numbers = #tpu.dot_dimension_numbers<[1], [0], [0], [1], [0, 0, 1, 1], [], []>} : vector<16x32xf32>, vector<32x64xf32>, vector<16x64xf32> -> vector<16x64xf32>
    %c0_3 = arith.constant 0 : index
    %c0_4 = arith.constant 0 : index
    %3 = vector.load %arg2[%c0_3, %c0_4] : memref<16x64xf32, #tpu.memory_space<vmem>>, vector<16x64xf32>
    %4 = arith.addf %2, %3 : vector<16x64xf32>
    %c0_5 = arith.constant 0 : index
    %c0_6 = arith.constant 0 : index
    %5 = vector.load %arg4[%c0_5, %c0_6] : memref<32x32xf32, #tpu.memory_space<vmem>>, vector<32x32xf32>
    %cst_7 = arith.constant dense<0.000000e+00> : vector<16x32xf32>
    %6 = tpu.matmul %0, %5, %cst_7 {dimension_numbers = #tpu.dot_dimension_numbers<[1], [0], [0], [1], [0, 0, 1, 1], [], []>} : vector<16x32xf32>, vector<32x32xf32>, vector<16x32xf32> -> vector<16x32xf32>
    %c0_8 = arith.constant 0 : index
    %c0_9 = arith.constant 0 : index
    %7 = vector.load %arg5[%c0_8, %c0_9] : memref<64x32xf32, #tpu.memory_space<vmem>>, vector<64x32xf32>
    %cst_10 = arith.constant dense<0.000000e+00> : vector<16x32xf32>
    %8 = tpu.matmul %4, %7, %cst_10 {dimension_numbers = #tpu.dot_dimension_numbers<[1], [0], [0], [1], [0, 0, 1, 1], [], []>} : vector<16x64xf32>, vector<64x32xf32>, vector<16x32xf32> -> vector<16x32xf32>
    %9 = arith.addf %6, %8 : vector<16x32xf32>
    %c0_11 = arith.constant 0 : index
    %c0_12 = arith.constant 0 : index
    %10 = vector.load %arg6[%c0_11, %c0_12] : memref<1x32xf32, #tpu.memory_space<vmem>>, vector<1x32xf32>
    %11 = vector.broadcast %10 : vector<1x32xf32> to vector<16x32xf32>
    %12 = arith.addf %9, %11 : vector<16x32xf32>
    %c0_13 = arith.constant 0 : index
    %c0_14 = arith.constant 0 : index
    %13 = vector.load %arg7[%c0_13, %c0_14] : memref<16x32xf32, #tpu.memory_space<vmem>>, vector<16x32xf32>
    tpu.vector_store %arg7[%c0_13, %c0_14], %12 {strides = array<i32>} : memref<16x32xf32, #tpu.memory_space<vmem>>, vector<16x32xf32>,
    return
  }
  func.func @transform_0(%arg0: i32) -> (i32, i32) {
    %c0_i32 = arith.constant 0 : i32
    %c0_i32_0 = arith.constant 0 : i32
    return %arg0, %c0_i32 : i32, i32
  }
  func.func @transform_1(%arg0: i32) -> (i32, i32) {
    %c0_i32 = arith.constant 0 : i32
    %c0_i32_0 = arith.constant 0 : i32
    %c0_i32_1 = arith.constant 0 : i32
    return %c0_i32, %c0_i32_0 : i32, i32
  }
  func.func @transform_2(%arg0: i32) -> (i32, i32) {
    %c0_i32 = arith.constant 0 : i32
    %c0_i32_0 = arith.constant 0 : i32
    %c0_i32_1 = arith.constant 0 : i32
    return %c0_i32, %c0_i32_0 : i32, i32
  }
  func.func @transform_3(%arg0: i32) -> (i32, i32) {
    %c0_i32 = arith.constant 0 : i32
    %c0_i32_0 = arith.constant 0 : i32
    %c0_i32_1 = arith.constant 0 : i32
    return %c0_i32, %c0_i32_0 : i32, i32
  }
  func.func @transform_4(%arg0: i32) -> (i32, i32) {
    %c0_i32 = arith.constant 0 : i32
    %c0_i32_0 = arith.constant 0 : i32
    %c0_i32_1 = arith.constant 0 : i32
    return %c0_i32, %c0_i32_0 : i32, i32
  }
  func.func @transform_5(%arg0: i32) -> (i32, i32) {
    %c0_i32 = arith.constant 0 : i32
    %c0_i32_0 = arith.constant 0 : i32
    %c0_i32_1 = arith.constant 0 : i32
    return %c0_i32, %c0_i32_0 : i32, i32
  }
  func.func @transform_6(%arg0: i32) -> (i32, i32) {
    %c0_i32 = arith.constant 0 : i32
    %c0_i32_0 = arith.constant 0 : i32
    return %arg0, %c0_i32 : i32, i32
  }
}

</mosaic_0001>

<llo_original>
// kernel: tpu_custom_call.1
$region0: #{tpu_custom_call.1}
  #allocation0 [shape = 'u32[]', space=smem, size = 0x4, offset = 0x4, fixed_abs, tag = 'smem constant byte address 0x4 - core index']
  #allocation1 [shape = 'u32[144,128]{1,0:T(1,128)}', space=vmem, size = 0x12000, scoped, tag = 'internal scratch']
  %s0 = inlined_call_operand.vmem [shape: f32[16,32], index: 0, kind: input, shape index: {}]
  %s1 = inlined_call_operand.vmem [shape: f32[16,64], index: 1, kind: input, shape index: {}]
  %s2 = inlined_call_operand.vmem [shape: f32[32,64], index: 2, kind: input, shape index: {}]
  %s3 = inlined_call_operand.vmem [shape: f32[32,32], index: 3, kind: input, shape index: {}]
  %s4 = inlined_call_operand.vmem [shape: f32[64,32], index: 4, kind: input, shape index: {}]
  %s5 = inlined_call_operand.vmem [shape: f32[1,32], index: 5, kind: input, shape index: {}]
  %s6 = inlined_call_operand.hbm [shape: f32[16,32], index: 6, kind: output, shape index: {}]
  %s7 = sld [smem:[#allocation0]]
  $region34: #{tpu_custom_call.1} parent=0
    _
  %s9 = ssub.s32 1, %s7
  %s10 = scalar_select 0, %s9, %s7
  $region1: #{tpu_custom_call.1} parent=0
    #allocation2 [shape = 'u8[8192]{0}', space=vmem, size = 0x2000, scoped, tag = 'output window, operand 0, single buffered']
    #allocation3 [shape = 's32[1]{0}', space=sflag, size = 0x4, scoped, tag = 'scoped memory for tpu_custom_call.1']
    %11 = vsyncpa [#allocation3], 0
    // Predicated region
    $region2: #{tpu_custom_call.1} parent=1 // pred_check
      _
    $region3: #{tpu_custom_call.1} parent=1 // pred_check_branch
      %13 = sbr.rel (0) target = $region5
    $region4: #{tpu_custom_call.1} parent=1 // pred_region
      _
    $region5: #{tpu_custom_call.1} parent=1 // pred_fallthru
      _
    // Predicated region
    $region6: #{tpu_custom_call.1} parent=1 // pred_check
      _
    $region7: #{tpu_custom_call.1} parent=1 // pred_check_branch
      %15 = sbr.rel (0) target = $region9
    $region8: #{tpu_custom_call.1} parent=1 // pred_region
      _
    $region9: #{tpu_custom_call.1} parent=1 // pred_fallthru
      _
    // Predicated region
    $region10: #{tpu_custom_call.1} parent=1 // pred_check
      _
    $region11: #{tpu_custom_call.1} parent=1 // pred_check_branch
      %17 = sbr.rel (0) target = $region13
    $region12: #{tpu_custom_call.1} parent=1 // pred_region
      _
    $region13: #{tpu_custom_call.1} parent=1 // pred_fallthru
      _
    // Predicated region
    $region14: #{tpu_custom_call.1} parent=1 // pred_check
      _
    $region15: #{tpu_custom_call.1} parent=1 // pred_check_branch
      %19 = sbr.rel (0) target = $region17
    $region16: #{tpu_custom_call.1} parent=1 // pred_region
      _
    $region17: #{tpu_custom_call.1} parent=1 // pred_fallthru
      _
    // Predicated region
    $region18: #{tpu_custom_call.1} parent=1 // pred_check
      _
    $region19: #{tpu_custom_call.1} parent=1 // pred_check_branch
      %21 = sbr.rel (0) target = $region21
    $region20: #{tpu_custom_call.1} parent=1 // pred_region
      _
    $region21: #{tpu_custom_call.1} parent=1 // pred_fallthru
      _
    // Predicated region
    $region22: #{tpu_custom_call.1} parent=1 // pred_check
      _
    $region23: #{tpu_custom_call.1} parent=1 // pred_check_branch
      %23 = sbr.rel (0) target = $region25
    $region24: #{tpu_custom_call.1} parent=1 // pred_region
      _
    $region25: #{tpu_custom_call.1} parent=1 // pred_fallthru
      _
    %v24 = vld [vmem:[%s0] sm:$0xff]
    %v25 = vld [vmem:[%s0 + $0x8] sm:$0xff]
    %v26 = vld [vmem:[%s2] sm:$0xff]
    %v27 = vld [vmem:[%s2 + $0x8] sm:$0xff]
    %v28 = vld [vmem:[%s2 + $0x10] sm:$0xff]
    %v29 = vld [vmem:[%s2 + $0x18] sm:$0xff]
    %v30 = vld [vmem:[%s1] sm:$0xff]
    %v31 = vld [vmem:[%s1 + $0x8] sm:$0xff]
    %vm32 = vcmask 261120
    %v34 = vsel %vm32, %v24, 0
    %v37 = vsel %vm32, %v25, 0
    %39 = vmatprep.subr.mxu0 0.0
    %40 = vmatpush1.msra.mxu0 0.0
    %41 = vmatprep.subr.mxu0 0.0
    %42 = vmatpush1.msra.mxu0 0.0
    %43 = vmatprep.subr.mxu0 0.0
    %44 = vmatpush1.msra.mxu0 0.0
    %45 = vmatprep.subr.mxu0 0.0
    %46 = vmatpush1.msra.mxu0 0.0
    %47 = vmatprep.subr.mxu0 0.0
    %48 = vmatpush1.msra.mxu0 0.0
    %49 = vmatprep.subr.mxu0 0.0
    %50 = vmatpush1.msra.mxu0 0.0
    %51 = vmatprep.subr.mxu0 0.0
    %52 = vmatpush1.msra.mxu0 0.0
    %53 = vmatprep.subr.mxu0 0.0
    %54 = vmatpush1.msra.mxu0 0.0
    %55 = vmatprep.subr.mxu0 0.0
    %56 = vmatpush1.msra.mxu0 0.0
    %57 = vmatprep.subr.mxu0 0.0
    %58 = vmatpush1.msra.mxu0 0.0
    %59 = vmatprep.subr.mxu0 0.0
    %60 = vmatpush1.msra.mxu0 0.0
    %61 = vmatprep.subr.mxu0 0.0
    %62 = vmatpush1.msra.mxu0 0.0
    %63 = vmatprep.subr.mxu0 0.0
    %64 = vmatpush1.msra.mxu0 %v29
    %65 = vmatprep.subr.mxu0 0.0
    %66 = vmatpush1.msra.mxu0 %v28
    %67 = vmatprep.subr.mxu0 0.0
    %68 = vmatpush1.msra.mxu0 %v27
    %69 = vmatprep.subr.mxu0 0.0
    %70 = vmatpush1.msra.mxu0 %v26
    %71 = vmatprep.subr.mxu0 0.0
    %72 = vmatpush2.msra.mxu0 0.0
    %73 = vmatprep.subr.mxu0 0.0
    %74 = vmatpush2.msra.mxu0 0.0
    %75 = vmatprep.subr.mxu0 0.0
    %76 = vmatpush2.msra.mxu0 0.0
    %77 = vmatprep.subr.mxu0 0.0
    %78 = vmatpush2.msra.mxu0 0.0
    %79 = vmatprep.subr.mxu0 0.0
    %80 = vmatpush2.msra.mxu0 0.0
    %81 = vmatprep.subr.mxu0 0.0
    %82 = vmatpush2.msra.mxu0 0.0
    %83 = vmatprep.subr.mxu0 0.0
    %84 = vmatpush2.msra.mxu0 0.0
    %85 = vmatprep.subr.mxu0 0.0
    %86 = vmatpush2.msra.mxu0 0.0
    %87 = vmatprep.subr.mxu0 0.0
    %88 = vmatpush2.msra.mxu0 0.0
    %89 = vmatprep.subr.mxu0 0.0
    %90 = vmatpush2.msra.mxu0 0.0
    %91 = vmatprep.subr.mxu0 0.0
    %92 = vmatpush2.msra.mxu0 0.0
    %93 = vmatprep.subr.mxu0 0.0
    %94 = vmatpush2.msra.mxu0 0.0
    %95 = vmatprep.subr.mxu0 0.0
    %96 = vmatpush2.msra.mxu0 0.0
    %97 = vmatprep.subr.mxu0 0.0
    %98 = vmatpush2.msra.mxu0 0.0
    %99 = vmatprep.subr.mxu0 0.0
    %100 = vmatpush2.msra.mxu0 0.0
    %101 = vmatprep.subr.mxu0 0.0
    %102 = vmatpush2.msra.mxu0 0.0
    %103 = vmatprep.mubr.f32.mxu0 0.0
    %104 = vmatmul.mubr.f32.gmra.mxu0 %v34
    %v105 = vpop.f32.mrf.mxu0
    %v106 = vadd.f32 %v30, %v105
    %v107 = vpop.f32.mrf.mxu0
    %108 = vmatprep.mubr.f32.mxu0 0.0
    %109 = vmatmul.mubr.f32.gmra.mxu0 %v37
    %v110 = vpop.f32.mrf.mxu0
    %v111 = vadd.f32 %v31, %v110
    %v112 = vpop.f32.mrf.mxu0
    %113 = vdwg.mxu0
    %v114 = vld [vmem:[%s3] sm:$0xff]
    %v115 = vld [vmem:[%s3 + $0x8] sm:$0xff]
    %v116 = vld [vmem:[%s3 + $0x10] sm:$0xff]
    %v117 = vld [vmem:[%s3 + $0x18] sm:$0xff]
    %v118 = vld [vmem:[%s4] sm:$0xff]
    %v119 = vld [vmem:[%s4 + $0x8] sm:$0xff]
    %v120 = vld [vmem:[%s4 + $0x10] sm:$0xff]
    %v121 = vld [vmem:[%s4 + $0x18] sm:$0xff]
    %v122 = vld [vmem:[%s4 + $0x20] sm:$0xff]
    %v123 = vld [vmem:[%s4 + $0x28] sm:$0xff]
    %v124 = vld [vmem:[%s4 + $0x30] sm:$0xff]
    %v125 = vld [vmem:[%s4 + $0x38] sm:$0xff]
    %vm126 = vcmask 523264
    %v128 = vsel %vm126, %v106, 0
    %v131 = vsel %vm126, %v111, 0
    %133 = vmatprep.subr.mxu0 0.0
    %134 = vmatpush1.msra.mxu0 0.0
    %135 = vmatprep.subr.mxu0 0.0
    %136 = vmatpush1.msra.mxu0 0.0
    %137 = vmatprep.subr.mxu0 0.0
    %138 = vmatpush1.msra.mxu0 0.0
    %139 = vmatprep.subr.mxu0 0.0
    %140 = vmatpush1.msra.mxu0 0.0
    %141 = vmatprep.subr.mxu0 0.0
    %142 = vmatpush1.msra.mxu0 0.0
    %143 = vmatprep.subr.mxu0 0.0
    %144 = vmatpush1.msra.mxu0 0.0
    %145 = vmatprep.subr.mxu0 0.0
    %146 = vmatpush1.msra.mxu0 0.0
    %147 = vmatprep.subr.mxu0 0.0
    %148 = vmatpush1.msra.mxu0 0.0
    %149 = vmatprep.subr.mxu0 0.0
    %150 = vmatpush1.msra.mxu0 %v125
    %151 = vmatprep.subr.mxu0 0.0
    %152 = vmatpush1.msra.mxu0 %v124
    %153 = vmatprep.subr.mxu0 0.0
    %154 = vmatpush1.msra.mxu0 %v123
    %155 = vmatprep.subr.mxu0 0.0
    %156 = vmatpush1.msra.mxu0 %v122
    %157 = vmatprep.subr.mxu0 0.0
    %158 = vmatpush1.msra.mxu0 %v121
    %159 = vmatprep.subr.mxu0 0.0
    %160 = vmatpush1.msra.mxu0 %v120
    %161 = vmatprep.subr.mxu0 0.0
    %162 = vmatpush1.msra.mxu0 %v119
    %163 = vmatprep.subr.mxu0 0.0
    %164 = vmatpush1.msra.mxu0 %v118
    %165 = vmatprep.subr.mxu0 0.0
    %166 = vmatpush2.msra.mxu0 0.0
    %167 = vmatprep.subr.mxu0 0.0
    %168 = vmatpush2.msra.mxu0 0.0
    %169 = vmatprep.subr.mxu0 0.0
    %170 = vmatpush2.msra.mxu0 0.0
    %171 = vmatprep.subr.mxu0 0.0
    %172 = vmatpush2.msra.mxu0 0.0
    %173 = vmatprep.subr.mxu0 0.0
    %174 = vmatpush2.msra.mxu0 0.0
    %175 = vmatprep.subr.mxu0 0.0
    %176 = vmatpush2.msra.mxu0 0.0
    %177 = vmatprep.subr.mxu0 0.0
    %178 = vmatpush2.msra.mxu0 0.0
    %179 = vmatprep.subr.mxu0 0.0
    %180 = vmatpush2.msra.mxu0 0.0
    %181 = vmatprep.subr.mxu0 0.0
    %182 = vmatpush2.msra.mxu0 0.0
    %183 = vmatprep.subr.mxu0 0.0
    %184 = vmatpush2.msra.mxu0 0.0
    %185 = vmatprep.subr.mxu0 0.0
    %186 = vmatpush2.msra.mxu0 0.0
    %187 = vmatprep.subr.mxu0 0.0
    %188 = vmatpush2.msra.mxu0 0.0
    %189 = vmatprep.subr.mxu0 0.0
    %190 = vmatpush2.msra.mxu0 0.0
    %191 = vmatprep.subr.mxu0 0.0
    %192 = vmatpush2.msra.mxu0 0.0
    %193 = vmatprep.subr.mxu0 0.0
    %194 = vmatpush2.msra.mxu0 0.0
    %195 = vmatprep.subr.mxu0 0.0
    %196 = vmatpush2.msra.mxu0 0.0
    %197 = vmatprep.mubr.f32.mxu0 0.0
    %198 = vmatmul.mubr.f32.gmra.mxu0 %v128
    %v199 = vpop.f32.mrf.mxu0
    %v200 = vadd.f32 0.0, %v199
    %v201 = vpop.f32.mrf.mxu0
    %202 = vmatprep.mubr.f32.mxu0 0.0
    %203 = vmatmul.mubr.f32.gmra.mxu0 %v131
    %v204 = vpop.f32.mrf.mxu0
    %v205 = vadd.f32 0.0, %v204
    %v206 = vpop.f32.mrf.mxu0
    %207 = vdwg.mxu0
    %208 = vmatprep.subr.mxu0 0.0
    %209 = vmatpush1.msra.mxu0 0.0
    %210 = vmatprep.subr.mxu0 0.0
    %211 = vmatpush1.msra.mxu0 0.0
    %212 = vmatprep.subr.mxu0 0.0
    %213 = vmatpush1.msra.mxu0 0.0
    %214 = vmatprep.subr.mxu0 0.0
    %215 = vmatpush1.msra.mxu0 0.0
    %216 = vmatprep.subr.mxu0 0.0
    %217 = vmatpush1.msra.mxu0 0.0
    %218 = vmatprep.subr.mxu0 0.0
    %219 = vmatpush1.msra.mxu0 0.0
    %220 = vmatprep.subr.mxu0 0.0
    %221 = vmatpush1.msra.mxu0 0.0
    %222 = vmatprep.subr.mxu0 0.0
    %223 = vmatpush1.msra.mxu0 0.0
    %224 = vmatprep.subr.mxu0 0.0
    %225 = vmatpush1.msra.mxu0 0.0
    %226 = vmatprep.subr.mxu0 0.0
    %227 = vmatpush1.msra.mxu0 0.0
    %228 = vmatprep.subr.mxu0 0.0
    %229 = vmatpush1.msra.mxu0 0.0
    %230 = vmatprep.subr.mxu0 0.0
    %231 = vmatpush1.msra.mxu0 0.0
    %232 = vmatprep.subr.mxu0 0.0
    %233 = vmatpush1.msra.mxu0 %v117
    %234 = vmatprep.subr.mxu0 0.0
    %235 = vmatpush1.msra.mxu0 %v116
    %236 = vmatprep.subr.mxu0 0.0
    %237 = vmatpush1.msra.mxu0 %v115
    %238 = vmatprep.subr.mxu0 0.0
    %239 = vmatpush1.msra.mxu0 %v114
    %240 = vmatprep.subr.mxu0 0.0
    %241 = vmatpush2.msra.mxu0 0.0
    %242 = vmatprep.subr.mxu0 0.0
    %243 = vmatpush2.msra.mxu0 0.0
    %244 = vmatprep.subr.mxu0 0.0
    %245 = vmatpush2.msra.mxu0 0.0
    %246 = vmatprep.subr.mxu0 0.0
    %247 = vmatpush2.msra.mxu0 0.0
    %248 = vmatprep.subr.mxu0 0.0
    %249 = vmatpush2.msra.mxu0 0.0
    %250 = vmatprep.subr.mxu0 0.0
    %251 = vmatpush2.msra.mxu0 0.0
    %252 = vmatprep.subr.mxu0 0.0
    %253 = vmatpush2.msra.mxu0 0.0
    %254 = vmatprep.subr.mxu0 0.0
    %255 = vmatpush2.msra.mxu0 0.0
    %256 = vmatprep.subr.mxu0 0.0
    %257 = vmatpush2.msra.mxu0 0.0
    %258 = vmatprep.subr.mxu0 0.0
    %259 = vmatpush2.msra.mxu0 0.0
    %260 = vmatprep.subr.mxu0 0.0
    %261 = vmatpush2.msra.mxu0 0.0
    %262 = vmatprep.subr.mxu0 0.0
    %263 = vmatpush2.msra.mxu0 0.0
    %264 = vmatprep.subr.mxu0 0.0
    %265 = vmatpush2.msra.mxu0 0.0
    %266 = vmatprep.subr.mxu0 0.0
    %267 = vmatpush2.msra.mxu0 0.0
    %268 = vmatprep.subr.mxu0 0.0
    %269 = vmatpush2.msra.mxu0 0.0
    %270 = vmatprep.subr.mxu0 0.0
    %271 = vmatpush2.msra.mxu0 0.0
    %272 = vmatprep.mubr.f32.mxu0 0.0
    %273 = vmatmul.mubr.f32.gmra.mxu0 %v34
    %v274 = vpop.f32.mrf.mxu0
    %v275 = vadd.f32 %v200, %v274
    %v276 = vpop.f32.mrf.mxu0
    %277 = vmatprep.mubr.f32.mxu0 0.0
    %278 = vmatmul.mubr.f32.gmra.mxu0 %v37
    %v279 = vpop.f32.mrf.mxu0
    %v280 = vadd.f32 %v205, %v279
    %v281 = vpop.f32.mrf.mxu0
    %282 = vdwg.mxu0
    %v283 = vld [vmem:[%s5] sm:$0x1]
    %v285 = vlaneseq
    %v286 = vshrl.u32 %v285, 7
    %v287 = vsub.s32 0, %v286
    %v288 = vrot.slane %v283, %v287
    %v290 = vadd.f32 %v275, %v288
    %v291 = vadd.f32 %v280, %v288
    %292 = vst.msk [vmem:[#allocation2] sm:$0xff] %vm32, %v290
    %293 = vst.msk [vmem:[#allocation2 + $0x8] sm:$0xff] %vm32, %v291
    // Predicated region
    $region26: #{tpu_custom_call.1} parent=1 // pred_check
      _
    $region27: #{tpu_custom_call.1} parent=1 // pred_check_branch
      %295 = sbr.rel (0) target = $region29
    $region28: #{tpu_custom_call.1} parent=1 // pred_region
      %s297 = ssub.s32 256, 256
      %298 = vsyncadd [#allocation3], %s297
      %s299 = sshll.u32 [#allocation2], 4
      %s300 = int_to_ptr.vmem [resolvable:$true] %s299
      %305 = dma.vmem_to_hbm [thread:$0]  %s300, 256, %s6, [#allocation3], 128, 128, 8
    $region29: #{tpu_custom_call.1} parent=1 // pred_fallthru
      _
    // Predicated region
    $region30: #{tpu_custom_call.1} parent=1 // pred_check
      _
    $region31: #{tpu_custom_call.1} parent=1 // pred_check_branch
      %307 = sbr.rel (0) target = $region33
    $region32: #{tpu_custom_call.1} parent=1 // pred_region
      %308 = dma.done [#allocation3], 256
    $region33: #{tpu_custom_call.1} parent=1 // pred_fallthru
      _
    %309 = vsyncpa [#allocation3], 1

</llo_original>
